<compile_context>
chip_gen: v6e
topology: v6e:2x2x1
jax: 0.10.0
libtpu: 0.0.40
codegen_flags: <defaults>
</compile_context>

<pallas_src>
import functools

import jax
import jax.numpy as jnp
import numpy as np
from jax.experimental import pallas as pl
from jax.experimental.pallas import tpu as pltpu


# ----------------------------------------------------------------------------
# Parameter setup (plain JAX glue): Symmetric parametrization of W
# ----------------------------------------------------------------------------
def symmetric_masks(L, A):
    """Replicates Symmetric.__init__ buffers (mask, mask_2)."""
    D = L * A
    mask = (jnp.ones((L, L)) - jnp.eye(L))[:, :, None, None]          # (L,L,1,1)
    mask = jnp.ones((L, L, A, A)) * mask                               # (L,L,A,A)
    mask = jnp.transpose(mask, (0, 2, 1, 3)).reshape(D, D)             # (D,D)
    mask_2 = np.ones((D, D), dtype=np.float32)
    for i in range(L):
        mask_2[i * A:(i + 1) * A, i * A:(i + 1) * A] = 0.0
    return mask.astype(jnp.float32), jnp.asarray(mask_2)


def symmetric_forward(X, mask, mask_2):
    """Replicates Symmetric.forward: (triu(X) + triu(X,1).T) * mask * mask_2."""
    triu0 = jnp.triu(X)
    triu1 = jnp.triu(X, 1)
    return (triu0 + jnp.swapaxes(triu1, -1, -2)) * mask * mask_2


# ----------------------------------------------------------------------------
# Pallas kernel
# ----------------------------------------------------------------------------
def _potts_energy_kernel(beta, block_n, x_ref, w_ref, h_ref, o_ref, acc_ref):
    """Per grid point (i, j): one batch tile x one column slab of W^T.

    x_ref  : (tb, Dp)  bf16  resident row block of x (block index constant in j)
    w_ref  : (Dp, tn)  bf16  column slab of W^T (streamed over j)
    h_ref  : (1, tn)   f32   field slab
    o_ref  : (tb, 1)   f32   per-row energy (written once at last j)
    acc_ref: (tb, tn)  f32   lane-wise VMEM accumulator
    """
    j = pl.program_id(1)

    @pl.when(j == 0)
    def _():
        acc_ref[...] = jnp.zeros_like(acc_ref)

    # MXU: bf16 x bf16 -> f32 accumulate.  w_ref holds W^T, so contracting on
    # its leading axis is exactly the nn.Linear `x @ W^T`.
    y = jnp.dot(x_ref[...], w_ref[...], preferred_element_type=jnp.float32)  # (tb, tn)

    # Epilogue column tile of x: lane-aligned slice of the resident block
    # (block_n is a static multiple of 128), upcast to f32.
    col = pl.multiple_of(j * block_n, block_n)
    x_tile = x_ref[:, pl.ds(col, block_n)].astype(jnp.float32)

    # VALU-only per-step accumulation; each column (and its h term) is visited
    # exactly once across the j axis, so there is no double counting.
    acc_ref[...] += x_tile * (y * (beta * 0.5) + h_ref[...])

    @pl.when(j == pl.num_programs(1) - 1)
    def _():
        # Single cross-lane (XLU) reduction, once per batch tile.
        o_ref[...] = jnp.sum(acc_ref[...], axis=1, keepdims=True)


def _round_up(n, m):
    return ((n + m - 1) // m) * m


def _vmem_capacity_bytes():
    try:
        return int(pltpu.get_tpu_info().vmem_capacity_bytes)
    except Exception:
        return 64 << 20  # conservative fallback (v7x per-TC VMEM)


def potts_energy(X, W_eff, h, beta=1.0, *, block_b=None, block_n=None):
    """X: (B, L, A) f32 one-hot, W_eff: (D, D), h: (D,). Returns (B,) energies.

    NOTE: x is cast to bf16, which is exact for one-hot {0,1} Potts inputs.
    General float X would round at bf16 precision.
    """
    B = X.shape[0]
    D = W_eff.shape[0]
    x = X.reshape(B, D)

    # Pad D to the 128-lane grain; batch to a multiple of 16 (bf16 sublane pack).
    Dp = _round_up(D, 128)
    Bp = _round_up(B, 16)

    cap = _vmem_capacity_bytes()
    budget = int(cap * 0.6)          # leave headroom for compiler scratch

    # Batch tile: large enough to amortize the W stream, clamped to the batch.
    if block_b is None:
        block_b = 256
    block_b = max(16, min(_round_up(block_b, 16), Bp))
    Bp = _round_up(B, block_b)

    def working_set(tb, tn):
        return (2 * tb * Dp * 2          # resident x block (bf16, double-buffered)
                + 2 * Dp * tn * 2        # W^T slab (bf16, double-buffered)
                + 2 * tn * 4             # h slab (f32, double-buffered)
                + tb * tn * 4            # acc scratch (f32)
                + 2 * tb * 4)            # output tile

    # Column slab width: largest 128-multiple divisor of Dp that fits VMEM.
    if block_n is None:
        cands = {t for t in (128, 256, 512, 1024) if Dp % t == 0}
        if Dp <= 4096:
            cands.add(Dp)                # single reduction step when D is small
        cands = sorted(cands, reverse=True)
        block_n = next((t for t in cands if working_set(block_b, t) <= budget),
                       cands[-1])
    assert Dp % block_n == 0

    # If still over budget (huge D + big batch tile), shrink the batch tile.
    while working_set(block_b, block_n) > budget and block_b > 16:
        block_b = max(16, (block_b // 2) // 8 * 8)
        Bp = _round_up(B, block_b)

    # Padded operands (padded rows/cols are zero -> energies unchanged).
    x_p = jnp.zeros((Bp, Dp), jnp.bfloat16).at[:B, :D].set(x.astype(jnp.bfloat16))
    w_p = jnp.zeros((Dp, Dp), jnp.bfloat16).at[:D, :D].set(
        W_eff.T.astype(jnp.bfloat16))                       # store W^T column slabs
    h_p = jnp.zeros((1, Dp), jnp.float32).at[0, :D].set(h.astype(jnp.float32))

    grid = (Bp // block_b, Dp // block_n)

    ws = working_set(block_b, block_n)
    vmem_limit = int(min(max(ws + (8 << 20), 32 << 20), int(cap * 0.7)))

    out = pl.pallas_call(
        functools.partial(_potts_energy_kernel, float(beta), block_n),
        out_shape=jax.ShapeDtypeStruct((Bp, 1), jnp.float32),
        grid_spec=pltpu.PrefetchScalarGridSpec(
            num_scalar_prefetch=0,
            grid=grid,
            in_specs=[
                pl.BlockSpec((block_b, Dp), lambda i, j: (i, 0)),      # x (resident)
                pl.BlockSpec((Dp, block_n), lambda i, j: (0, j)),      # W^T col slab
                pl.BlockSpec((1, block_n), lambda i, j: (0, j)),       # h slab
            ],
            out_specs=pl.BlockSpec((block_b, 1), lambda i, j: (i, 0)),
            scratch_shapes=[pltpu.VMEM((block_b, block_n), jnp.float32)],
        ),
        compiler_params=pltpu.CompilerParams(
            dimension_semantics=("parallel", "arbitrary"),
            vmem_limit_bytes=vmem_limit,
        ),
    )(x_p, w_p, h_p)
    return out[:B, 0]


# ----------------------------------------------------------------------------
# Reference (plain JAX), using the module's exact formula x @ W^T
# ----------------------------------------------------------------------------
def potts_energy_ref(X, W, h, beta=1.0):
    B = X.shape[0]
    D = W.shape[0]
    x = X.reshape(B, D).astype(jnp.float32)
    y = x @ W.T                                  # nn.Linear(bias=False)
    return jnp.sum(x * (y * beta / 2.0 + h), axis=1)


if __name__ == "__main__":
    # Small shapes consistent with the module: L positions, A amino-acid states.
    # D = 12*21 = 252 -> padded to 256.
    L, A, B = 12, 21, 8
    D = L * A
    beta = 1.0

    key = jax.random.PRNGKey(0)
    k_w, k_h, k_x = jax.random.split(key, 3)

    # Deterministic synthetic parameters.
    W_raw = jax.random.normal(k_w, (D, D), dtype=jnp.float32) * 0.1
    h = jax.random.normal(k_h, (D,), dtype=jnp.float32) * 0.1

    # Apply the Symmetric parametrization to get the effective Linear weight.
    mask, mask_2 = symmetric_masks(L, A)
    W_eff = symmetric_forward(W_raw, mask, mask_2)

    # One-hot input X of shape (B, L, A).
    idx = jax.random.randint(k_x, (B, L), 0, A)
    X = jax.nn.one_hot(idx, A, dtype=jnp.float32)                      # (B, L, A)

    out = jax.block_until_ready(potts_energy(X, W_eff, h, beta=beta))

    # Reference uses the bf16-rounded weights (the same values the kernel
    # consumes); the bf16 cast of one-hot X is exact, so this isolates only
    # the weight-precision difference.
    W_bf = W_eff.astype(jnp.bfloat16).astype(jnp.float32)
    ref = potts_energy_ref(X, W_bf, h, beta=beta)
    np.testing.assert_allclose(np.asarray(out), np.asarray(ref),
                               rtol=1e-4, atol=2e-4)

    print("KERNEL_OK")
</pallas_src>

<mosaic_0001>
module attributes {stable_mosaic.version = 11 : i64} {
  func.func @_potts_energy_kernel(%arg0: i32, %arg1: i32, %arg2: memref<16x256xbf16, #tpu.memory_space<vmem>>, %arg3: memref<256x256xbf16, #tpu.memory_space<vmem>>, %arg4: memref<1x256xf32, #tpu.memory_space<vmem>>, %arg5: memref<16x1xf32, #tpu.memory_space<vmem>>, %arg6: memref<16x256xf32, #tpu.memory_space<vmem>>) attributes {dimension_semantics = [#tpu.dimension_semantics<parallel>, #tpu.dimension_semantics<arbitrary>], iteration_bounds = array<i64: 1, 1>, scalar_prefetch = 0 : i64, scratch_operands = 1 : i64, tpu.core_type = #tpu.core_type<tc>, window_params = [{transform_indices = @transform_0, window_bounds = array<i64: 16, 256>}, {transform_indices = @transform_1, window_bounds = array<i64: 256, 256>}, {transform_indices = @transform_2, window_bounds = array<i64: 1, 256>}, {transform_indices = @transform_3, window_bounds = array<i64: 16, 1>}]} {
    %c0_i32 = arith.constant 0 : i32
    %0 = arith.cmpi eq, %arg1, %c0_i32 : i32
    %1 = arith.extui %0 : i1 to i32
    %c0_i32_0 = arith.constant 0 : i32
    %2 = arith.cmpi ne, %1, %c0_i32_0 : i32
    scf.if %2 {
      %cst_14 = arith.constant 0.000000e+00 : f32
      %23 = vector.broadcast %cst_14 : f32 to vector<16x256xf32>
      %c0_15 = arith.constant 0 : index
      %c0_16 = arith.constant 0 : index
      %24 = vector.load %arg6[%c0_15, %c0_16] : memref<16x256xf32, #tpu.memory_space<vmem>>, vector<16x256xf32>
      tpu.vector_store %arg6[%c0_15, %c0_16], %23 {strides = array<i32>} : memref<16x256xf32, #tpu.memory_space<vmem>>, vector<16x256xf32>,
    } else {
    }
    %c0 = arith.constant 0 : index
    %c0_1 = arith.constant 0 : index
    %3 = vector.load %arg2[%c0, %c0_1] : memref<16x256xbf16, #tpu.memory_space<vmem>>, vector<16x256xbf16>
    %c0_2 = arith.constant 0 : index
    %c0_3 = arith.constant 0 : index
    %4 = vector.load %arg3[%c0_2, %c0_3] : memref<256x256xbf16, #tpu.memory_space<vmem>>, vector<256x256xbf16>
    %cst = arith.constant dense<0.000000e+00> : vector<16x256xf32>
    %5 = tpu.matmul %3, %4, %cst {dimension_numbers = #tpu.dot_dimension_numbers<[1], [0], [0], [1], [0, 0, 1, 1], [], []>} : vector<16x256xbf16>, vector<256x256xbf16>, vector<16x256xf32> -> vector<16x256xf32>
    %c256_i32 = arith.constant 256 : i32
    %6 = arith.muli %arg1, %c256_i32 : i32
    %7 = tpu.assume_multiple %6, 256 : i32
    %c0_4 = arith.constant 0 : index
    %8 = arith.index_cast %7 : i32 to index
    %9 = vector.load %arg2[%c0_4, %8] : memref<16x256xbf16, #tpu.memory_space<vmem>>, vector<16x256xbf16>
    %10 = arith.extf %9 : vector<16x256xbf16> to vector<16x256xf32>
    %c0_5 = arith.constant 0 : index
    %c0_6 = arith.constant 0 : index
    %11 = vector.load %arg6[%c0_5, %c0_6] : memref<16x256xf32, #tpu.memory_space<vmem>>, vector<16x256xf32>
    %cst_7 = arith.constant 5.000000e-01 : f32
    %12 = vector.broadcast %cst_7 : f32 to vector<16x256xf32>
    %13 = arith.mulf %5, %12 : vector<16x256xf32>
    %c0_8 = arith.constant 0 : index
    %c0_9 = arith.constant 0 : index
    %14 = vector.load %arg4[%c0_8, %c0_9] : memref<1x256xf32, #tpu.memory_space<vmem>>, vector<1x256xf32>
    %15 = vector.broadcast %14 : vector<1x256xf32> to vector<16x256xf32>
    %16 = arith.addf %13, %15 : vector<16x256xf32>
    %17 = arith.mulf %10, %16 : vector<16x256xf32>
    %18 = arith.addf %11, %17 : vector<16x256xf32>
    %c0_10 = arith.constant 0 : index
    %c0_11 = arith.constant 0 : index
    %19 = vector.load %arg6[%c0_10, %c0_11] : memref<16x256xf32, #tpu.memory_space<vmem>>, vector<16x256xf32>
    tpu.vector_store %arg6[%c0_10, %c0_11], %18 {strides = array<i32>} : memref<16x256xf32, #tpu.memory_space<vmem>>, vector<16x256xf32>,
    %c0_i32_12 = arith.constant 0 : i32
    %20 = arith.cmpi eq, %arg1, %c0_i32_12 : i32
    %21 = arith.extui %20 : i1 to i32
    %c0_i32_13 = arith.constant 0 : i32
    %22 = arith.cmpi ne, %21, %c0_i32_13 : i32
    scf.if %22 {
      %c0_14 = arith.constant 0 : index
      %c0_15 = arith.constant 0 : index
      %23 = vector.load %arg6[%c0_14, %c0_15] : memref<16x256xf32, #tpu.memory_space<vmem>>, vector<16x256xf32>
      %cst_16 = arith.constant dense<0.000000e+00> : vector<16xf32>
      %24 = vector.multi_reduction <add>, %23, %cst_16 [1] : vector<16x256xf32> to vector<16xf32>
      %25 = vector.shape_cast %24 : vector<16xf32> to vector<16x1xf32>
      %c0_17 = arith.constant 0 : index
      %c0_18 = arith.constant 0 : index
      %26 = vector.load %arg5[%c0_17, %c0_18] : memref<16x1xf32, #tpu.memory_space<vmem>>, vector<16x1xf32>
      tpu.vector_store %arg5[%c0_17, %c0_18], %25 {strides = array<i32>} : memref<16x1xf32, #tpu.memory_space<vmem>>, vector<16x1xf32>,
    } else {
    }
    return
  }
  func.func @transform_0(%arg0: i32, %arg1: i32) -> (i32, i32) {
    %c0_i32 = arith.constant 0 : i32
    %c0_i32_0 = arith.constant 0 : i32
    return %arg0, %c0_i32 : i32, i32
  }
  func.func @transform_1(%arg0: i32, %arg1: i32) -> (i32, i32) {
    %c0_i32 = arith.constant 0 : i32
    %c0_i32_0 = arith.constant 0 : i32
    return %c0_i32, %arg1 : i32, i32
  }
  func.func @transform_2(%arg0: i32, %arg1: i32) -> (i32, i32) {
    %c0_i32 = arith.constant 0 : i32
    %c0_i32_0 = arith.constant 0 : i32
    return %c0_i32, %arg1 : i32, i32
  }
  func.func @transform_3(%arg0: i32, %arg1: i32) -> (i32, i32) {
    %c0_i32 = arith.constant 0 : i32
    %c0_i32_0 = arith.constant 0 : i32
    return %arg0, %c0_i32 : i32, i32
  }
}

</mosaic_0001>

<llo_original>
// kernel: tpu_custom_call.1
$region0: #{tpu_custom_call.1}
  #allocation0 [shape = 'u32[]', space=smem, size = 0x4, offset = 0x4, fixed_abs, tag = 'smem constant byte address 0x4 - core index']
  #allocation1 [shape = 'u32[144,128]{1,0:T(1,128)}', space=vmem, size = 0x12000, scoped, tag = 'internal scratch']
  #allocation2 [shape = 'f32[16,256]{1,0:T(8,128)}', space=vmem, size = 0x4000, scoped, tag = 'scratch operand']
  %s0 = inlined_call_operand.hbm [shape: bf16[16,256], index: 0, kind: input, shape index: {}]
  %s1 = inlined_call_operand.hbm [shape: bf16[256,256], index: 1, kind: input, shape index: {}]
  %s2 = inlined_call_operand.vmem [shape: f32[1,256], index: 2, kind: input, shape index: {}]
  %s3 = inlined_call_operand.vmem [shape: f32[16,1], index: 3, kind: output, shape index: {}]
  %s4 = sld [smem:[#allocation0]]
  $region38: #{tpu_custom_call.1} parent=0
    _
  %s6 = ssub.s32 1, %s4
  %s7 = scalar_select 0, %s6, %s4
  $region1: #{tpu_custom_call.1} parent=0
    #allocation3 [shape = 'u8[8192]{0}', space=vmem, size = 0x2000, scoped, tag = 'input window, operand 0, single buffered']
    #allocation4 [shape = 's32[1]{0}', space=sflag, size = 0x4, scoped, tag = 'scoped memory for tpu_custom_call.1']
    #allocation5 [shape = 'u8[131072]{0}', space=vmem, size = 0x20000, scoped, tag = 'input window, operand 1, single buffered']
    #allocation6 [shape = 's32[1]{0}', space=sflag, size = 0x4, scoped, tag = 'scoped memory for tpu_custom_call.1']
    %8 = vsyncpa [#allocation4], 0
    %9 = vsyncpa [#allocation6], 0
    // Predicated region
    $region2: #{tpu_custom_call.1} parent=1 // pred_check
      _
    $region3: #{tpu_custom_call.1} parent=1 // pred_check_branch
      %11 = sbr.rel (0) target = $region5
    $region4: #{tpu_custom_call.1} parent=1 // pred_region
      %s13 = ssub.s32 256, 256
      %14 = vsyncadd [#allocation4], %s13
      %s15 = sshll.u32 [#allocation3], 4
      %s16 = int_to_ptr.vmem [resolvable:$true] %s15
      %21 = dma.hbm_to_vmem [thread:$0]  %s0, 256, %s16, [#allocation4], 128, 128, 8
    $region5: #{tpu_custom_call.1} parent=1 // pred_fallthru
      _
    // Predicated region
    $region6: #{tpu_custom_call.1} parent=1 // pred_check
      _
    $region7: #{tpu_custom_call.1} parent=1 // pred_check_branch
      %23 = sbr.rel (0) target = $region9
    $region8: #{tpu_custom_call.1} parent=1 // pred_region
      %s25 = ssub.s32 4096, 4096
      %26 = vsyncadd [#allocation6], %s25
      %s27 = sshll.u32 [#allocation5], 4
      %s28 = int_to_ptr.vmem [resolvable:$true] %s27
      %33 = dma.hbm_to_vmem [thread:$0]  %s1, 4096, %s28, [#allocation6], 128, 128, 8
    $region9: #{tpu_custom_call.1} parent=1 // pred_fallthru
      _
    // Predicated region
    $region10: #{tpu_custom_call.1} parent=1 // pred_check
      _
    $region11: #{tpu_custom_call.1} parent=1 // pred_check_branch
      %35 = sbr.rel (0) target = $region13
    $region12: #{tpu_custom_call.1} parent=1 // pred_region
      _
    $region13: #{tpu_custom_call.1} parent=1 // pred_fallthru
      _
    // Predicated region
    $region14: #{tpu_custom_call.1} parent=1 // pred_check
      _
    $region15: #{tpu_custom_call.1} parent=1 // pred_check_branch
      %37 = sbr.rel (0) target = $region17
    $region16: #{tpu_custom_call.1} parent=1 // pred_region
      %38 = dma.done [#allocation4], 256
    $region17: #{tpu_custom_call.1} parent=1 // pred_fallthru
      _
    // Predicated region
    $region18: #{tpu_custom_call.1} parent=1 // pred_check
      _
    $region19: #{tpu_custom_call.1} parent=1 // pred_check_branch
      %40 = sbr.rel (0) target = $region21
    $region20: #{tpu_custom_call.1} parent=1 // pred_region
      %41 = dma.done [#allocation6], 4096
    $region21: #{tpu_custom_call.1} parent=1 // pred_fallthru
      _
    %p42 = scmp.eq.s32.totalorder 0, 0
    // Predicated region
    $region22: #{tpu_custom_call.1} parent=1 // pred_check
      %p43 = pneg %p42
    $region23: #{tpu_custom_call.1} parent=1 // pred_check_branch
      %45 = sbr.rel (%p43) target = $region25
    $region24: #{tpu_custom_call.1} parent=1 // pred_region
      %46 = vst [vmem:[#allocation2] sm:$0xff] 0.0
      %47 = vst [vmem:[#allocation2 + $0x8] sm:$0xff] 0.0
      %48 = vst [vmem:[#allocation2 + $0x10] sm:$0xff] 0.0
      %49 = vst [vmem:[#allocation2 + $0x18] sm:$0xff] 0.0
    $region25: #{tpu_custom_call.1} parent=1 // pred_fallthru
      _
    %v50 = vld [vmem:[#allocation3] sm:$0xff]
    %v51 = vld [vmem:[#allocation3 + $0x8] sm:$0xff]
    %v52 = vld [vmem:[#allocation5] sm:$0xff]
    %v53 = vld [vmem:[#allocation5 + $0x8] sm:$0xff]
    %v54 = vld [vmem:[#allocation5 + $0x10] sm:$0xff]
    %v55 = vld [vmem:[#allocation5 + $0x18] sm:$0xff]
    %v56 = vld [vmem:[#allocation5 + $0x20] sm:$0xff]
    %v57 = vld [vmem:[#allocation5 + $0x28] sm:$0xff]
    %v58 = vld [vmem:[#allocation5 + $0x30] sm:$0xff]
    %v59 = vld [vmem:[#allocation5 + $0x38] sm:$0xff]
    %v60 = vld [vmem:[#allocation5 + $0x40] sm:$0xff]
    %v61 = vld [vmem:[#allocation5 + $0x48] sm:$0xff]
    %v62 = vld [vmem:[#allocation5 + $0x50] sm:$0xff]
    %v63 = vld [vmem:[#allocation5 + $0x58] sm:$0xff]
    %v64 = vld [vmem:[#allocation5 + $0x60] sm:$0xff]
    %v65 = vld [vmem:[#allocation5 + $0x68] sm:$0xff]
    %v66 = vld [vmem:[#allocation5 + $0x70] sm:$0xff]
    %v67 = vld [vmem:[#allocation5 + $0x78] sm:$0xff]
    %v68 = vld [vmem:[#allocation5 + $0x80] sm:$0xff]
    %v69 = vld [vmem:[#allocation5 + $0x88] sm:$0xff]
    %v70 = vld [vmem:[#allocation5 + $0x90] sm:$0xff]
    %v71 = vld [vmem:[#allocation5 + $0x98] sm:$0xff]
    %v72 = vld [vmem:[#allocation5 + $0xa0] sm:$0xff]
    %v73 = vld [vmem:[#allocation5 + $0xa8] sm:$0xff]
    %v74 = vld [vmem:[#allocation5 + $0xb0] sm:$0xff]
    %v75 = vld [vmem:[#allocation5 + $0xb8] sm:$0xff]
    %v76 = vld [vmem:[#allocation5 + $0xc0] sm:$0xff]
    %v77 = vld [vmem:[#allocation5 + $0xc8] sm:$0xff]
    %v78 = vld [vmem:[#allocation5 + $0xd0] sm:$0xff]
    %v79 = vld [vmem:[#allocation5 + $0xd8] sm:$0xff]
    %v80 = vld [vmem:[#allocation5 + $0xe0] sm:$0xff]
    %v81 = vld [vmem:[#allocation5 + $0xe8] sm:$0xff]
    %v82 = vld [vmem:[#allocation5 + $0xf0] sm:$0xff]
    %v83 = vld [vmem:[#allocation5 + $0xf8] sm:$0xff]
    %v86 = vunpack.c.l.b16 %v50
    %v87 = vunpack.c.h.b16 %v50
    %v88 = vunpack.c.l.b16 %v51
    %v89 = vunpack.c.h.b16 %v51
    %v90 = vpack.c.b16 %v88, %v86
    %v91 = vpack.c.b16 %v89, %v87
    %v126 = vunpack.c.l.b16 %v52
    %v127 = vunpack.c.h.b16 %v52
    %v128 = vunpack.c.l.b16 %v53
    %v129 = vunpack.c.h.b16 %v53
    %v130 = vunpack.c.l.b16 %v54
    %v131 = vunpack.c.h.b16 %v54
    %v132 = vunpack.c.l.b16 %v55
    %v133 = vunpack.c.h.b16 %v55
    %v134 = vunpack.c.l.b16 %v56
    %v135 = vunpack.c.h.b16 %v56
    %v136 = vunpack.c.l.b16 %v57
    %v137 = vunpack.c.h.b16 %v57
    %v138 = vunpack.c.l.b16 %v58
    %v139 = vunpack.c.h.b16 %v58
    %v140 = vunpack.c.l.b16 %v59
    %v141 = vunpack.c.h.b16 %v59
    %v142 = vunpack.c.l.b16 %v60
    %v143 = vunpack.c.h.b16 %v60
    %v144 = vunpack.c.l.b16 %v61
    %v145 = vunpack.c.h.b16 %v61
    %v146 = vunpack.c.l.b16 %v62
    %v147 = vunpack.c.h.b16 %v62
    %v148 = vunpack.c.l.b16 %v63
    %v149 = vunpack.c.h.b16 %v63
    %v150 = vunpack.c.l.b16 %v64
    %v151 = vunpack.c.h.b16 %v64
    %v152 = vunpack.c.l.b16 %v65
    %v153 = vunpack.c.h.b16 %v65
    %v154 = vunpack.c.l.b16 %v66
    %v155 = vunpack.c.h.b16 %v66
    %v156 = vunpack.c.l.b16 %v67
    %v157 = vunpack.c.h.b16 %v67
    %v158 = vunpack.c.l.b16 %v68
    %v159 = vunpack.c.h.b16 %v68
    %v160 = vunpack.c.l.b16 %v69
    %v161 = vunpack.c.h.b16 %v69
    %v162 = vunpack.c.l.b16 %v70
    %v163 = vunpack.c.h.b16 %v70
    %v164 = vunpack.c.l.b16 %v71
    %v165 = vunpack.c.h.b16 %v71
    %v166 = vunpack.c.l.b16 %v72
    %v167 = vunpack.c.h.b16 %v72
    %v168 = vunpack.c.l.b16 %v73
    %v169 = vunpack.c.h.b16 %v73
    %v170 = vunpack.c.l.b16 %v74
    %v171 = vunpack.c.h.b16 %v74
    %v172 = vunpack.c.l.b16 %v75
    %v173 = vunpack.c.h.b16 %v75
    %v174 = vunpack.c.l.b16 %v76
    %v175 = vunpack.c.h.b16 %v76
    %v176 = vunpack.c.l.b16 %v77
    %v177 = vunpack.c.h.b16 %v77
    %v178 = vunpack.c.l.b16 %v78
    %v179 = vunpack.c.h.b16 %v78
    %v180 = vunpack.c.l.b16 %v79
    %v181 = vunpack.c.h.b16 %v79
    %v182 = vunpack.c.l.b16 %v80
    %v183 = vunpack.c.h.b16 %v80
    %v184 = vunpack.c.l.b16 %v81
    %v185 = vunpack.c.h.b16 %v81
    %v186 = vunpack.c.l.b16 %v82
    %v187 = vunpack.c.h.b16 %v82
    %v188 = vunpack.c.l.b16 %v83
    %v189 = vunpack.c.h.b16 %v83
    %v190 = vpack.c.b16 %v128, %v126
    %v191 = vpack.c.b16 %v129, %v127
    %v192 = vpack.c.b16 %v132, %v130
    %v193 = vpack.c.b16 %v133, %v131
    %v194 = vpack.c.b16 %v136, %v134
    %v195 = vpack.c.b16 %v137, %v135
    %v196 = vpack.c.b16 %v140, %v138
    %v197 = vpack.c.b16 %v141, %v139
    %v198 = vpack.c.b16 %v144, %v142
    %v199 = vpack.c.b16 %v145, %v143
    %v200 = vpack.c.b16 %v148, %v146
    %v201 = vpack.c.b16 %v149, %v147
    %v202 = vpack.c.b16 %v152, %v150
    %v203 = vpack.c.b16 %v153, %v151
    %v204 = vpack.c.b16 %v156, %v154
    %v205 = vpack.c.b16 %v157, %v155
    %v206 = vpack.c.b16 %v160, %v158
    %v207 = vpack.c.b16 %v161, %v159
    %v208 = vpack.c.b16 %v164, %v162
    %v209 = vpack.c.b16 %v165, %v163
    %v210 = vpack.c.b16 %v168, %v166
    %v211 = vpack.c.b16 %v169, %v167
    %v212 = vpack.c.b16 %v172, %v170
    %v213 = vpack.c.b16 %v173, %v171
    %v214 = vpack.c.b16 %v176, %v174
    %v215 = vpack.c.b16 %v177, %v175
    %v216 = vpack.c.b16 %v180, %v178
    %v217 = vpack.c.b16 %v181, %v179
    %v218 = vpack.c.b16 %v184, %v182
    %v219 = vpack.c.b16 %v185, %v183
    %v220 = vpack.c.b16 %v188, %v186
    %v221 = vpack.c.b16 %v189, %v187
    %254 = vmatprep.subr.bf16.mxu0 %v205
    %255 = vmatpush1.bf16.msra.mxu0 %v204
    %256 = vmatprep.subr.bf16.mxu0 %v203
    %257 = vmatpush1.bf16.msra.mxu0 %v202
    %258 = vmatprep.subr.bf16.mxu0 %v201
    %259 = vmatpush1.bf16.msra.mxu0 %v200
    %260 = vmatprep.subr.bf16.mxu0 %v199
    %261 = vmatpush1.bf16.msra.mxu0 %v198
    %262 = vmatprep.subr.bf16.mxu0 %v197
    %263 = vmatpush1.bf16.msra.mxu0 %v196
    %264 = vmatprep.subr.bf16.mxu0 %v195
    %265 = vmatpush1.bf16.msra.mxu0 %v194
    %266 = vmatprep.subr.bf16.mxu0 %v193
    %267 = vmatpush1.bf16.msra.mxu0 %v192
    %268 = vmatprep.subr.bf16.mxu0 %v191
    %269 = vmatpush1.bf16.msra.mxu0 %v190
    %270 = vmatprep.subr.bf16.mxu0 %v221
    %271 = vmatpush2.bf16.msra.mxu0 %v220
    %272 = vmatprep.subr.bf16.mxu0 %v219
    %273 = vmatpush2.bf16.msra.mxu0 %v218
    %274 = vmatprep.subr.bf16.mxu0 %v217
    %275 = vmatpush2.bf16.msra.mxu0 %v216
    %276 = vmatprep.subr.bf16.mxu0 %v215
    %277 = vmatpush2.bf16.msra.mxu0 %v214
    %278 = vmatprep.subr.bf16.mxu0 %v213
    %279 = vmatpush2.bf16.msra.mxu0 %v212
    %280 = vmatprep.subr.bf16.mxu0 %v211
    %281 = vmatpush2.bf16.msra.mxu0 %v210
    %282 = vmatprep.subr.bf16.mxu0 %v209
    %283 = vmatpush2.bf16.msra.mxu0 %v208
    %284 = vmatprep.subr.bf16.mxu0 %v207
    %285 = vmatpush2.bf16.msra.mxu0 %v206
    %286 = vmatprep.mubr.bf16.mxu0 %v91
    %287 = vmatmul.mubr.bf16.gmra.mxu0 %v90
    %v288 = vpop.f32.mrf.mxu0
    %v289 = vadd.f32 0.0, %v288
    %v290 = vpop.f32.mrf.mxu0
    %v291 = vadd.f32 0.0, %v290
    %v292 = vpop.f32.mrf.mxu0
    %v293 = vadd.f32 0.0, %v292
    %v294 = vpop.f32.mrf.mxu0
    %v295 = vadd.f32 0.0, %v294
    %296 = vdwg.mxu0
    %s297 = smul.u32 0, 256
    %s298 = sshra.s32 %s297, 7
    %s299 = sand.u32 %s297, 127
    %s300 = smul.addr %s298, 4
    %s301 = scalar_lea.vmem [#allocation3], %s300
    %v302 = vld [vmem:[%s301] sm:$0xff]
    %v303 = vld [vmem:[%s301 + $0x8] sm:$0xff]
    %v304 = vunpack.c.l.bf16 %v302
    %v305 = vunpack.c.h.bf16 %v302
    %v306 = vunpack.c.l.bf16 %v303
    %v307 = vunpack.c.h.bf16 %v303
    %v308 = vld [vmem:[#allocation2] sm:$0xff]
    %v309 = vld [vmem:[#allocation2 + $0x8] sm:$0xff]
    %v310 = vld [vmem:[#allocation2 + $0x10] sm:$0xff]
    %v311 = vld [vmem:[#allocation2 + $0x18] sm:$0xff]
    %v312 = vmul.f32 %v289, 0.5
    %v313 = vmul.f32 %v291, 0.5
    %v314 = vmul.f32 %v293, 0.5
    %v315 = vmul.f32 %v295, 0.5
    %v316 = vld [vmem:[%s2] sm:$0x3]
    %v318 = vlaneseq
    %v319 = vshrl.u32 %v318, 7
    %v320 = vsub.s32 0, %v319
    %v321 = vrot.slane %v316, %v320
    %v322 = vlaneseq
    %v323 = vshrl.u32 %v322, 7
    %v324 = vsub.s32 1, %v323
    %v325 = vrot.slane %v316, %v324
    %v328 = vadd.f32 %v312, %v321
    %v329 = vadd.f32 %v313, %v325
    %v330 = vadd.f32 %v314, %v321
    %v331 = vadd.f32 %v315, %v325
    %v332 = vmul.f32 %v304, %v328
    %v333 = vmul.f32 %v305, %v329
    %v334 = vmul.f32 %v306, %v330
    %v335 = vmul.f32 %v307, %v331
    %v336 = vadd.f32 %v308, %v332
    %v337 = vadd.f32 %v309, %v333
    %v338 = vadd.f32 %v310, %v334
    %v339 = vadd.f32 %v311, %v335
    %340 = vst [vmem:[#allocation2] sm:$0xff] %v336
    %341 = vst [vmem:[#allocation2 + $0x8] sm:$0xff] %v337
    %342 = vst [vmem:[#allocation2 + $0x10] sm:$0xff] %v338
    %343 = vst [vmem:[#allocation2 + $0x18] sm:$0xff] %v339
    // Predicated region
    $region26: #{tpu_custom_call.1} parent=1 // pred_check
      %p344 = pneg %p42
    $region27: #{tpu_custom_call.1} parent=1 // pred_check_branch
      %346 = sbr.rel (%p344) target = $region29
    $region28: #{tpu_custom_call.1} parent=1 // pred_region
      %v347 = vld [vmem:[#allocation2] sm:$0xff]
      %v348 = vld [vmem:[#allocation2 + $0x8] sm:$0xff]
      %v349 = vld [vmem:[#allocation2 + $0x10] sm:$0xff]
      %v350 = vld [vmem:[#allocation2 + $0x18] sm:$0xff]
      %v351 = vadd.f32 %v347, %v348
      %352 = vadd.xlane.f32.xlu0 %v351
      %v353 = vpop.xlane.xlu0 %352
      %v354 = vadd.f32 %v349, %v350
      %355 = vadd.xlane.f32.xlu0 %v354
      %v356 = vpop.xlane.xlu0 %355
      %vm357 = vcmask 7168
      %358 = vst.msk [vmem:[%s3] sm:$0xff] %vm357, %v353
      %359 = vst.msk [vmem:[%s3 + $0x8] sm:$0xff] %vm357, %v356
    $region29: #{tpu_custom_call.1} parent=1 // pred_fallthru
      _
    // Predicated region
    $region30: #{tpu_custom_call.1} parent=1 // pred_check
      _
    $region31: #{tpu_custom_call.1} parent=1 // pred_check_branch
      %361 = sbr.rel (0) target = $region33
    $region32: #{tpu_custom_call.1} parent=1 // pred_region
      _
    $region33: #{tpu_custom_call.1} parent=1 // pred_fallthru
      _
    // Predicated region
    $region34: #{tpu_custom_call.1} parent=1 // pred_check
      _
    $region35: #{tpu_custom_call.1} parent=1 // pred_check_branch
      %363 = sbr.rel (0) target = $region37
    $region36: #{tpu_custom_call.1} parent=1 // pred_region
      _
    $region37: #{tpu_custom_call.1} parent=1 // pred_fallthru
      _
    %364 = vsyncpa [#allocation4], 1
    %365 = vsyncpa [#allocation6], 1

</llo_original>
